<compile_context>
chip_gen: v7x
topology: tpu7x:2x2x1
jax: 0.10.0
libtpu: 0.0.40
codegen_flags: <defaults>
</compile_context>

<pallas_src>
import jax
import jax.numpy as jnp
from jax.experimental import pallas as pl
from jax.experimental.pallas import tpu as pltpu


# ---------------------------------------------------------------------------
# Kernel 1 (label=None fast path): last-timestep output only.
# Tiny, grid-less, everything VMEM resident.
# ---------------------------------------------------------------------------
def _out_kernel(u_last_ref, z_ref, w_u_ref, w_z_ref, b_ref, out_ref):
    z = z_ref[...].astype(jnp.float32)                      # (B, n_state)
    zwb = jnp.dot(z, w_z_ref[...].astype(jnp.float32),
                  preferred_element_type=jnp.float32)
    zwb = zwb + b_ref[...].astype(jnp.float32)              # (B, n_state)
    u_last = u_last_ref[...].astype(jnp.float32)            # (B, n_in)
    out = jnp.dot(u_last, w_u_ref[...].astype(jnp.float32),
                  preferred_element_type=jnp.float32) + zwb
    out_ref[...] = out.astype(out_ref.dtype)                # outs[:, -1, :]


# ---------------------------------------------------------------------------
# Kernel 2 (label path): fused  out + sum-of-squared-errors, seq-major layout.
# grid = (B, num_seq_tiles); seq is the inner ("arbitrary") axis, batch is
# "parallel".  Per-batch outputs/scratch are resident across the seq axis.
# ---------------------------------------------------------------------------
def _make_sse_kernel(seq_len, tile_s, last_col):
    def kernel(u_ref, lab_ref, zwb_ref, w_u_ref, out_ref, sse_ref, acc_sc):
        si = pl.program_id(1)
        num_s = pl.num_programs(1)

        @pl.when(si == 0)
        def _init():
            acc_sc[...] = jnp.zeros_like(acc_sc)

        # outs_T = W_u^T @ u_tile_T + (z @ W_z + b)^T   (lane dim = sequence)
        # Mathematically identical to concat([u, z], -1) @ W + b.
        outs_t = jnp.dot(w_u_ref[...], u_ref[0].astype(jnp.float32),
                         preferred_element_type=jnp.float32)   # (n_state, tile_s)
        outs_t = outs_t + zwb_ref[0]                            # broadcast (n_state, 1)

        diff = outs_t - lab_ref[0].astype(jnp.float32)
        # Mask padded lanes of the (possibly partial) last seq tile.
        lane = jax.lax.broadcasted_iota(jnp.int32, diff.shape, 1)
        valid = lane < (seq_len - si * tile_s)
        diff = jnp.where(valid, diff, 0.0)
        acc_sc[...] += diff * diff          # pure VPU accumulate (no per-step reduce)

        @pl.when(si == num_s - 1)
        def _fini():
            # One XLU reduce per batch -> per-batch partial SSE.
            sse_tile = jnp.broadcast_to(jnp.sum(acc_sc[...], keepdims=True), (8, 128))
            sse_ref[0] = sse_tile.astype(sse_ref.dtype)
            # out = outs[:, -1, :]  == last valid column of the last seq tile.
            out_ref[0] = outs_t[:, last_col:last_col + 1].astype(out_ref.dtype)

    return kernel


# ---------------------------------------------------------------------------
# Wrapper matching NeuralPredictor.forward(u, z, t, label=None).
# ---------------------------------------------------------------------------
def neural_predictor_forward(u, z, t, w, b, label=None):
    del t  # accepted but unused by the reference forward()
    B, S, n_in = u.shape
    n_state = z.shape[1]

    w = w.astype(jnp.float32)
    w_u = w[:n_in, :]                                       # (n_in, n_state)
    w_z = w[n_in:, :]                                       # (n_state, n_state)
    b2 = b.reshape(1, n_state).astype(jnp.float32)

    if label is None:
        # Fast path: no label -> no loss work, no label DMA, no full-seq matmul.
        u_last = u[:, -1, :]                                # (B, n_in)
        vmem = pl.BlockSpec(memory_space=pltpu.MemorySpace.VMEM)
        return pl.pallas_call(
            _out_kernel,
            out_shape=jax.ShapeDtypeStruct((B, n_state), jnp.float32),
            in_specs=[vmem, vmem, vmem, vmem, vmem],
            out_specs=vmem,
        )(u_last, z, w_u, w_z, b2)

    # ----- label path: one fused pallas_call, lane-dense seq-major layout -----
    # zwb = z @ W_z + b is a tiny (B, n_state) matmul; cheaper in XLA than an
    # extra kernel launch + HBM round-trip (review opt #8).
    zwb = jnp.dot(z.astype(jnp.float32), w_z) + b2          # (B, n_state)
    zwb_col = zwb[:, :, None]                               # (B, n_state, 1)
    w_u_t = w_u.T                                           # (n_state, n_in)
    u_t = jnp.swapaxes(u, 1, 2).astype(jnp.float32)         # (B, n_in, S)
    label_t = jnp.swapaxes(label, 1, 2).astype(jnp.float32) # (B, n_state, S)

    # Fixed-cap seq tile: either the full sequence (<=512) or a 128-multiple
    # tile with an in-kernel tail mask.  Small enough to double-buffer within
    # the default scoped VMEM on v5e/v6e/v7x for moderate n_state.
    tile_s = S if S <= 512 else 512
    num_s = pl.cdiv(S, tile_s)
    last_col = (S - 1) - (num_s - 1) * tile_s

    kernel = _make_sse_kernel(S, tile_s, last_col)

    out3, sse_b = pl.pallas_call(
        kernel,
        out_shape=(
            jax.ShapeDtypeStruct((B, n_state, 1), jnp.float32),   # outs[:, -1, :]^T
            jax.ShapeDtypeStruct((B, 8, 128), jnp.float32),       # per-batch SSE (splat tile)
        ),
        grid_spec=pltpu.PrefetchScalarGridSpec(
            num_scalar_prefetch=0,
            grid=(B, num_s),
            in_specs=[
                pl.BlockSpec((1, n_in, tile_s), lambda bi, si: (bi, 0, si)),     # u^T tile
                pl.BlockSpec((1, n_state, tile_s), lambda bi, si: (bi, 0, si)),  # label^T tile
                pl.BlockSpec((1, n_state, 1), lambda bi, si: (bi, 0, 0)),        # zwb (per batch)
                pl.BlockSpec((n_state, n_in), lambda bi, si: (0, 0)),            # W_u^T (resident)
            ],
            out_specs=(
                pl.BlockSpec((1, n_state, 1), lambda bi, si: (bi, 0, 0)),
                pl.BlockSpec((1, 8, 128), lambda bi, si: (bi, 0, 0)),
            ),
            scratch_shapes=[pltpu.VMEM((n_state, tile_s), jnp.float32)],         # SSE accumulator
        ),
        compiler_params=pltpu.CompilerParams(
            # Per-batch partials + per-batch outputs -> batch axis is safely
            # parallel (v7x megacore); seq axis carries the accumulator.
            dimension_semantics=("parallel", "arbitrary"),
        ),
    )(u_t, label_t, zwb_col, w_u_t)

    out = out3[:, :, 0]                                     # (B, n_state)
    loss = jnp.sum(sse_b[:, 0, 0]) / jnp.float32(B * S * n_state)   # MSELoss(mean)
    return out, loss


# ---------------------------------------------------------------------------
# Plain-JAX reference of the PyTorch forward (for correctness checks).
# ---------------------------------------------------------------------------
def _reference_forward(u, z, w, b, label):
    B, S, _ = u.shape
    repeated_z = jnp.broadcast_to(z[:, None, :], (B, S, z.shape[1]))
    x = jnp.concatenate([u, repeated_z], axis=-1)
    outs = x @ w + b
    out = outs[:, -1, :]
    loss = jnp.mean((outs - label) ** 2)
    return out, loss


if __name__ == "__main__":
    # Small shapes consistent with the module.
    B, seq_len, n_input, n_state = 2, 8, 4, 32
    n_input_channel = n_input + n_state

    key = jax.random.PRNGKey(0)
    ku, kz, kt, kw, kb, kl = jax.random.split(key, 6)

    u = jax.random.normal(ku, (B, seq_len, n_input), dtype=jnp.float32)
    z = jax.random.normal(kz, (B, n_state), dtype=jnp.float32)
    t = jax.random.normal(kt, (B, seq_len), dtype=jnp.float32)   # unused by forward()
    label = jax.random.normal(kl, (B, seq_len, n_state), dtype=jnp.float32)

    # Deterministic parameters for the (instantiated) linear `compute`.
    w = jax.random.normal(kw, (n_input_channel, n_state), dtype=jnp.float32) * 0.05
    b = jax.random.normal(kb, (n_state,), dtype=jnp.float32) * 0.05

    # Label path: (out, loss).
    out, loss = neural_predictor_forward(u, z, t, w, b, label=label)
    out = jax.block_until_ready(out)
    loss = jax.block_until_ready(loss)

    # No-label fast path: out only.
    out_only = jax.block_until_ready(neural_predictor_forward(u, z, t, w, b))

    ref_out, ref_loss = _reference_forward(u, z, w, b, label)
    assert out.shape == (B, n_state)
    assert out_only.shape == (B, n_state)
    assert jnp.allclose(out, ref_out, atol=1e-5, rtol=1e-5)
    assert jnp.allclose(out_only, ref_out, atol=1e-5, rtol=1e-5)
    assert jnp.allclose(loss, ref_loss, atol=1e-5, rtol=1e-5)

    print("KERNEL_OK")
</pallas_src>

<mosaic_0001>
module attributes {stable_mosaic.version = 11 : i64} {
  func.func @kernel(%arg0: i32, %arg1: i32, %arg2: memref<1x4x8xf32, #tpu.memory_space<vmem>>, %arg3: memref<1x32x8xf32, #tpu.memory_space<vmem>>, %arg4: memref<1x32x1xf32, #tpu.memory_space<vmem>>, %arg5: memref<32x4xf32, #tpu.memory_space<vmem>>, %arg6: memref<1x32x1xf32, #tpu.memory_space<vmem>>, %arg7: memref<1x8x128xf32, #tpu.memory_space<vmem>>, %arg8: memref<32x8xf32, #tpu.memory_space<vmem>>) attributes {dimension_semantics = [#tpu.dimension_semantics<parallel>, #tpu.dimension_semantics<arbitrary>], iteration_bounds = array<i64: 2, 1>, scalar_prefetch = 0 : i64, scratch_operands = 1 : i64, tpu.core_type = #tpu.core_type<tc>, window_params = [{transform_indices = @transform_0, window_bounds = array<i64: 1, 4, 8>}, {transform_indices = @transform_1, window_bounds = array<i64: 1, 32, 8>}, {transform_indices = @transform_2, window_bounds = array<i64: 1, 32, 1>}, {pipeline_mode = #tpu.pipeline_mode<synchronous>, transform_indices = @transform_3, window_bounds = array<i64: 32, 4>}, {transform_indices = @transform_4, window_bounds = array<i64: 1, 32, 1>}, {transform_indices = @transform_5, window_bounds = array<i64: 1, 8, 128>}]} {
    %c0_i32 = arith.constant 0 : i32
    %0 = arith.cmpi eq, %arg1, %c0_i32 : i32
    %1 = arith.extui %0 : i1 to i32
    %c0_i32_0 = arith.constant 0 : i32
    %2 = arith.cmpi ne, %1, %c0_i32_0 : i32
    scf.if %2 {
      %cst_19 = arith.constant 0.000000e+00 : f32
      %28 = vector.broadcast %cst_19 : f32 to vector<32x8xf32>
      %c0_20 = arith.constant 0 : index
      %c0_21 = arith.constant 0 : index
      %29 = vector.load %arg8[%c0_20, %c0_21] : memref<32x8xf32, #tpu.memory_space<vmem>>, vector<32x8xf32>
      tpu.vector_store %arg8[%c0_20, %c0_21], %28 {strides = array<i32>} : memref<32x8xf32, #tpu.memory_space<vmem>>, vector<32x8xf32>,
    } else {
    }
    %c0 = arith.constant 0 : index
    %c0_1 = arith.constant 0 : index
    %3 = vector.load %arg5[%c0, %c0_1] : memref<32x4xf32, #tpu.memory_space<vmem>>, vector<32x4xf32>
    %c0_2 = arith.constant 0 : index
    %c0_3 = arith.constant 0 : index
    %c0_4 = arith.constant 0 : index
    %4 = vector.load %arg2[%c0_2, %c0_3, %c0_4] : memref<1x4x8xf32, #tpu.memory_space<vmem>>, vector<1x4x8xf32>
    %5 = vector.shape_cast %4 : vector<1x4x8xf32> to vector<4x8xf32>
    %cst = arith.constant dense<0.000000e+00> : vector<32x8xf32>
    %6 = tpu.matmul %3, %5, %cst {dimension_numbers = #tpu.dot_dimension_numbers<[1], [0], [0], [1], [0, 0, 1, 1], [], []>} : vector<32x4xf32>, vector<4x8xf32>, vector<32x8xf32> -> vector<32x8xf32>
    %c0_5 = arith.constant 0 : index
    %c0_6 = arith.constant 0 : index
    %c0_7 = arith.constant 0 : index
    %7 = vector.load %arg4[%c0_5, %c0_6, %c0_7] : memref<1x32x1xf32, #tpu.memory_space<vmem>>, vector<1x32x1xf32>
    %8 = vector.shape_cast %7 : vector<1x32x1xf32> to vector<32x1xf32>
    %9 = vector.broadcast %8 : vector<32x1xf32> to vector<32x8xf32>
    %10 = arith.addf %6, %9 : vector<32x8xf32>
    %c0_8 = arith.constant 0 : index
    %c0_9 = arith.constant 0 : index
    %c0_10 = arith.constant 0 : index
    %11 = vector.load %arg3[%c0_8, %c0_9, %c0_10] : memref<1x32x8xf32, #tpu.memory_space<vmem>>, vector<1x32x8xf32>
    %12 = vector.shape_cast %11 : vector<1x32x8xf32> to vector<32x8xf32>
    %13 = arith.subf %10, %12 : vector<32x8xf32>
    %14 = tpu.iota {dimensions = array<i32: 1>} : vector<32x8xi32>
    %c8_i32 = arith.constant 8 : i32
    %15 = arith.muli %arg1, %c8_i32 : i32
    %c8_i32_11 = arith.constant 8 : i32
    %16 = arith.subi %c8_i32_11, %15 : i32
    %17 = vector.broadcast %16 : i32 to vector<32x8xi32>
    %18 = arith.cmpi slt, %14, %17 : vector<32x8xi32>
    %cst_12 = arith.constant 0.000000e+00 : f32
    %19 = vector.broadcast %cst_12 : f32 to vector<32x8xf32>
    %20 = arith.select %18, %13, %19 : vector<32x8xi1>, vector<32x8xf32>
    %c0_13 = arith.constant 0 : index
    %c0_14 = arith.constant 0 : index
    %21 = vector.load %arg8[%c0_13, %c0_14] : memref<32x8xf32, #tpu.memory_space<vmem>>, vector<32x8xf32>
    %22 = arith.mulf %20, %20 : vector<32x8xf32>
    %23 = arith.addf %21, %22 : vector<32x8xf32>
    %c0_15 = arith.constant 0 : index
    %c0_16 = arith.constant 0 : index
    %24 = vector.load %arg8[%c0_15, %c0_16] : memref<32x8xf32, #tpu.memory_space<vmem>>, vector<32x8xf32>
    tpu.vector_store %arg8[%c0_15, %c0_16], %23 {strides = array<i32>} : memref<32x8xf32, #tpu.memory_space<vmem>>, vector<32x8xf32>,
    %c0_i32_17 = arith.constant 0 : i32
    %25 = arith.cmpi eq, %arg1, %c0_i32_17 : i32
    %26 = arith.extui %25 : i1 to i32
    %c0_i32_18 = arith.constant 0 : i32
    %27 = arith.cmpi ne, %26, %c0_i32_18 : i32
    scf.if %27 {
      %c0_19 = arith.constant 0 : index
      %c0_20 = arith.constant 0 : index
      %28 = vector.load %arg8[%c0_19, %c0_20] : memref<32x8xf32, #tpu.memory_space<vmem>>, vector<32x8xf32>
      %29 = vector.shape_cast %28 : vector<32x8xf32> to vector<1x32x8xf32>
      %cst_21 = arith.constant dense<0.000000e+00> : vector<1xf32>
      %30 = vector.multi_reduction <add>, %29, %cst_21 [1, 2] : vector<1x32x8xf32> to vector<1xf32>
      %31 = vector.shape_cast %30 : vector<1xf32> to vector<1x1x1xf32>
      %32 = vector.extract %31[0, 0, 0] : f32 from vector<1x1x1xf32>
      %33 = vector.broadcast %32 : f32 to vector<1x1xf32>
      %34 = vector.shape_cast %33 : vector<1x1xf32> to vector<1x1xf32>
      %35 = vector.broadcast %34 : vector<1x1xf32> to vector<8x128xf32>
      %c0_22 = arith.constant 0 : index
      %c0_23 = arith.constant 0 : index
      %c0_24 = arith.constant 0 : index
      %36 = vector.load %arg7[%c0_22, %c0_23, %c0_24] : memref<1x8x128xf32, #tpu.memory_space<vmem>>, vector<1x8x128xf32>
      %37 = vector.shape_cast %36 : vector<1x8x128xf32> to vector<8x128xf32>
      %38 = vector.shape_cast %35 : vector<8x128xf32> to vector<1x8x128xf32>
      tpu.vector_store %arg7[%c0_22, %c0_23, %c0_24], %38 {strides = array<i32>} : memref<1x8x128xf32, #tpu.memory_space<vmem>>, vector<1x8x128xf32>,
      %39 = vector.extract_strided_slice %10 {offsets = [0, 7], sizes = [32, 1], strides = [1, 1]} : vector<32x8xf32> to vector<32x1xf32>
      %c0_25 = arith.constant 0 : index
      %c0_26 = arith.constant 0 : index
      %c0_27 = arith.constant 0 : index
      %40 = vector.load %arg6[%c0_25, %c0_26, %c0_27] : memref<1x32x1xf32, #tpu.memory_space<vmem>>, vector<1x32x1xf32>
      %41 = vector.shape_cast %40 : vector<1x32x1xf32> to vector<32x1xf32>
      %42 = vector.shape_cast %39 : vector<32x1xf32> to vector<1x32x1xf32>
      tpu.vector_store %arg6[%c0_25, %c0_26, %c0_27], %42 {strides = array<i32>} : memref<1x32x1xf32, #tpu.memory_space<vmem>>, vector<1x32x1xf32>,
    } else {
    }
    return
  }
  func.func @transform_0(%arg0: i32, %arg1: i32) -> (i32, i32, i32) {
    %c0_i32 = arith.constant 0 : i32
    %c0_i32_0 = arith.constant 0 : i32
    return %arg0, %c0_i32, %arg1 : i32, i32, i32
  }
  func.func @transform_1(%arg0: i32, %arg1: i32) -> (i32, i32, i32) {
    %c0_i32 = arith.constant 0 : i32
    %c0_i32_0 = arith.constant 0 : i32
    return %arg0, %c0_i32, %arg1 : i32, i32, i32
  }
  func.func @transform_2(%arg0: i32, %arg1: i32) -> (i32, i32, i32) {
    %c0_i32 = arith.constant 0 : i32
    %c0_i32_0 = arith.constant 0 : i32
    %c0_i32_1 = arith.constant 0 : i32
    return %arg0, %c0_i32, %c0_i32_0 : i32, i32, i32
  }
  func.func @transform_3(%arg0: i32, %arg1: i32) -> (i32, i32) {
    %c0_i32 = arith.constant 0 : i32
    %c0_i32_0 = arith.constant 0 : i32
    %c0_i32_1 = arith.constant 0 : i32
    return %c0_i32, %c0_i32_0 : i32, i32
  }
  func.func @transform_4(%arg0: i32, %arg1: i32) -> (i32, i32, i32) {
    %c0_i32 = arith.constant 0 : i32
    %c0_i32_0 = arith.constant 0 : i32
    %c0_i32_1 = arith.constant 0 : i32
    return %arg0, %c0_i32, %c0_i32_0 : i32, i32, i32
  }
  func.func @transform_5(%arg0: i32, %arg1: i32) -> (i32, i32, i32) {
    %c0_i32 = arith.constant 0 : i32
    %c0_i32_0 = arith.constant 0 : i32
    %c0_i32_1 = arith.constant 0 : i32
    return %arg0, %c0_i32, %c0_i32_0 : i32, i32, i32
  }
}

</mosaic_0001>

<llo_original>
// kernel: tpu_custom_call.1
$region0: #{tpu_custom_call.1}
  #allocation0 [shape = 'u32[]', space=smem, size = 0x4, offset = 0x4, fixed_abs, tag = 'smem constant byte address 0x4 - core index']
  #allocation1 [shape = 'u32[144,128]{1,0:T(1,128)}', space=vmem, size = 0x12000, scoped, tag = 'internal scratch']
  #allocation2 [shape = 'f32[32,8]{1,0:T(8,128)}', space=vmem, size = 0x4000, scoped, tag = 'scratch operand']
  %s0 = inlined_call_operand.vmem [shape: f32[2,4,8], index: 0, kind: input, shape index: {}]
  %s1 = inlined_call_operand.vmem [shape: f32[2,32,8], index: 1, kind: input, shape index: {}]
  %s2 = inlined_call_operand.vmem [shape: f32[2,32,1], index: 2, kind: input, shape index: {}]
  %s3 = inlined_call_operand.vmem [shape: f32[32,4], index: 3, kind: input, shape index: {}]
  %s4 = inlined_call_operand.vmem [shape: f32[2,32,1], index: 4, kind: output, shape index: {0}]
  %s5 = inlined_call_operand.hbm [shape: f32[2,8,128], index: 5, kind: output, shape index: {1}]
  %6 = xla_tuple %s4, %s5
  %s7 = sld [smem:[#allocation0]]
  $region65: #{tpu_custom_call.1} parent=0
    _
  %s9 = ssub.s32 1, %s7
  %s10 = scalar_select 0, %s9, %s7
  $region1: #{tpu_custom_call.1} parent=0
    #allocation3 [shape = 'u8[8192]{0}', space=vmem, size = 0x2000, scoped, tag = 'output window, operand 1']
    #allocation4 [shape = 's32[2]{0}', space=sflag, size = 0x8, scoped, tag = 'scoped memory for tpu_custom_call.1']
    %11 = vsyncpa [#allocation4], 0
    %s12 = scalar_lea.sflag [#allocation4], 1
    %13 = vsyncpa %s12, 0
    loop: start=0, step=1, limit=4
    $region2: #{tpu_custom_call.1} parent=1 // loop_pre_header
      _
    $region3: #{tpu_custom_call.1} parent=1 // loop_header
      %s15 = sphi 0, %s19
      %p16 = scmp.ge.s32.totalorder %s15, 4
      %s22 = sphi 0, %s34
      %s23 = sphi 0, %s30
      %s24 = sphi 0, %s22
      %s25 = sphi 0, %s23
      %s26 = sphi 0, %s24
      %s27 = sphi 0, %s25
      %s39 = sphi 0, %s41
      %s42 = sphi 0, %s39
      %s43 = sphi 0, %s42
      %s59 = sphi 0, %s43
      %s67 = sphi 0, %s69
      %s70 = sphi 0, %s67
      %s71 = sphi 0, %s70
      %s87 = sphi 0, %s71
      %s93 = sphi 0, %s95
      %s96 = sphi 0, %s93
      %s97 = sphi 0, %s96
      %s113 = sphi 0, %s97
      %s117 = sphi 0, %s117
      %s119 = sphi 0, %s117
      %s120 = sphi 0, %s119
      %s134 = sphi 0, %s120
      %s140 = sphi 0, %s142
      %s143 = sphi 0, %s140
      %s144 = sphi 0, %s143
      %s160 = sphi 0, %s144
      %s166 = sphi 0, %s168
      %s169 = sphi 0, %s166
      %s170 = sphi 0, %s169
      %s186 = sphi 0, %s170
    $region4: #{tpu_custom_call.1} parent=1 // loop_header_branch
      %18 = sbr.rel (%p16) target = $region8
    $region5: #{tpu_custom_call.1} parent=1 // loop_body
      %s20 = ssub.s32 %s15, 1
      %s21 = ssub.s32 %s15, 2
      %s28 = sadd.s32 1, %s23
      %p29 = scmp.ge.s32.totalorder %s28, 1
      %s30 = scalar_select %p29, 0, %s28
      %s31 = sadd.s32 1, %s22
      %s32 = scalar_select %p29, %s31, %s22
      %p33 = scmp.ge.s32.totalorder %s32, 2
      %s34 = scalar_select %p33, 0, %s32
      %s35 = ssub.s32 %s22, %s34
      %s36 = ssub.s32 %s23, %s30
      %s37 = sor.u32 %s35, %s36
      %p38 = scmp.eq.s32.totalorder %s37, 0
      %s40 = sadd.s32 %s39, 1
      %s41 = scalar_select %p38, %s39, %s40
      %p44 = pneg %p38
      %p45 = scmp.eq.s32.totalorder %s15, 1
      %p46 = por %p44, %p45
      %p47 = scmp.ne.s32.totalorder %s39, %s42
      %p48 = scmp.eq.s32.totalorder %s15, 0
      %p49 = por %p47, %p48
      %p50 = scmp.ne.s32.totalorder %s39, %s42
      %p51 = scmp.eq.s32.totalorder %s20, 1
      %p52 = por %p50, %p51
      %p53 = scmp.ne.s32.totalorder %s42, %s43
      %p54 = scmp.eq.s32.totalorder %s20, 0
      %p55 = por %p53, %p54
      %p56 = scmp.ne.s32.totalorder %s42, %s43
      %p57 = scmp.eq.s32.totalorder %s21, 1
      %p58 = por %p56, %p57
      %p60 = scmp.ne.s32.totalorder %s43, %s59
      %p61 = scmp.eq.s32.totalorder %s21, 0
      %p62 = por %p60, %p61
      %s63 = ssub.s32 %s22, %s34
      %s64 = ssub.s32 %s23, %s30
      %s65 = sor.u32 %s63, %s64
      %p66 = scmp.eq.s32.totalorder %s65, 0
      %s68 = sadd.s32 %s67, 1
      %s69 = scalar_select %p66, %s67, %s68
      %p72 = pneg %p66
      %p73 = scmp.eq.s32.totalorder %s15, 1
      %p74 = por %p72, %p73
      %p75 = scmp.ne.s32.totalorder %s67, %s70
      %p76 = scmp.eq.s32.totalorder %s15, 0
      %p77 = por %p75, %p76
      %p78 = scmp.ne.s32.totalorder %s67, %s70
      %p79 = scmp.eq.s32.totalorder %s20, 1
      %p80 = por %p78, %p79
      %p81 = scmp.ne.s32.totalorder %s70, %s71
      %p82 = scmp.eq.s32.totalorder %s20, 0
      %p83 = por %p81, %p82
      %p84 = scmp.ne.s32.totalorder %s70, %s71
      %p85 = scmp.eq.s32.totalorder %s21, 1
      %p86 = por %p84, %p85
      %p88 = scmp.ne.s32.totalorder %s71, %s87
      %p89 = scmp.eq.s32.totalorder %s21, 0
      %p90 = por %p88, %p89
      %s91 = ssub.s32 %s22, %s34
      %p92 = scmp.eq.s32.totalorder %s91, 0
      %s94 = sadd.s32 %s93, 1
      %s95 = scalar_select %p92, %s93, %s94
      %p98 = pneg %p92
      %p99 = scmp.eq.s32.totalorder %s15, 1
      %p100 = por %p98, %p99
      %p101 = scmp.ne.s32.totalorder %s93, %s96
      %p102 = scmp.eq.s32.totalorder %s15, 0
      %p103 = por %p101, %p102
      %p104 = scmp.ne.s32.totalorder %s93, %s96
      %p105 = scmp.eq.s32.totalorder %s20, 1
      %p106 = por %p104, %p105
      %p107 = scmp.ne.s32.totalorder %s96, %s97
      %p108 = scmp.eq.s32.totalorder %s20, 0
      %p109 = por %p107, %p108
      %p110 = scmp.ne.s32.totalorder %s96, %s97
      %p111 = scmp.eq.s32.totalorder %s21, 1
      %p112 = por %p110, %p111
      %p114 = scmp.ne.s32.totalorder %s97, %s113
      %p115 = scmp.eq.s32.totalorder %s21, 0
      %p116 = por %p114, %p115
      %s118 = sadd.s32 %s117, 1
      %p121 = scmp.eq.s32.totalorder %s15, 1
      %p122 = scmp.ne.s32.totalorder %s117, %s119
      %p123 = scmp.eq.s32.totalorder %s15, 0
      %p124 = por %p122, %p123
      %p125 = scmp.ne.s32.totalorder %s117, %s119
      %p126 = scmp.eq.s32.totalorder %s20, 1
      %p127 = por %p125, %p126
      %p128 = scmp.ne.s32.totalorder %s119, %s120
      %p129 = scmp.eq.s32.totalorder %s20, 0
      %p130 = por %p128, %p129
      %p131 = scmp.ne.s32.totalorder %s119, %s120
      %p132 = scmp.eq.s32.totalorder %s21, 1
      %p133 = por %p131, %p132
      %p135 = scmp.ne.s32.totalorder %s120, %s134
      %p136 = scmp.eq.s32.totalorder %s21, 0
      %p137 = por %p135, %p136
      %s138 = ssub.s32 %s22, %s34
      %p139 = scmp.eq.s32.totalorder %s138, 0
      %s141 = sadd.s32 %s140, 1
      %s142 = scalar_select %p139, %s140, %s141
      %p145 = pneg %p139
      %p146 = scmp.eq.s32.totalorder %s15, 1
      %p147 = por %p145, %p146
      %p148 = scmp.ne.s32.totalorder %s140, %s143
      %p149 = scmp.eq.s32.totalorder %s15, 0
      %p150 = por %p148, %p149
      %p151 = scmp.ne.s32.totalorder %s140, %s143
      %p152 = scmp.eq.s32.totalorder %s20, 1
      %p153 = por %p151, %p152
      %p154 = scmp.ne.s32.totalorder %s143, %s144
      %p155 = scmp.eq.s32.totalorder %s20, 0
      %p156 = por %p154, %p155
      %p157 = scmp.ne.s32.totalorder %s143, %s144
      %p158 = scmp.eq.s32.totalorder %s21, 1
      %p159 = por %p157, %p158
      %p161 = scmp.ne.s32.totalorder %s144, %s160
      %p162 = scmp.eq.s32.totalorder %s21, 0
      %p163 = por %p161, %p162
      %s164 = ssub.s32 %s22, %s34
      %p165 = scmp.eq.s32.totalorder %s164, 0
      %s167 = sadd.s32 %s166, 1
      %s168 = scalar_select %p165, %s166, %s167
      %p171 = pneg %p165
      %p172 = scmp.eq.s32.totalorder %s15, 1
      %p173 = por %p171, %p172
      %p174 = scmp.ne.s32.totalorder %s166, %s169
      %p175 = scmp.eq.s32.totalorder %s15, 0
      %p176 = por %p174, %p175
      %p177 = scmp.ne.s32.totalorder %s166, %s169
      %p178 = scmp.eq.s32.totalorder %s20, 1
      %p179 = por %p177, %p178
      %p180 = scmp.ne.s32.totalorder %s169, %s170
      %p181 = scmp.eq.s32.totalorder %s20, 0
      %p182 = por %p180, %p181
      %p183 = scmp.ne.s32.totalorder %s169, %s170
      %p184 = scmp.eq.s32.totalorder %s21, 1
      %p185 = por %p183, %p184
      %p187 = scmp.ne.s32.totalorder %s170, %s186
      %p188 = scmp.eq.s32.totalorder %s21, 0
      %p189 = por %p187, %p188
      %p190 = scmp.le.s32.totalorder 1, %s15
      %p191 = scmp.lt.s32.totalorder %s15, 3
      %p192 = pnand %p190, %p191
      %p193 = pneg %p192
      // Predicated region
      $region9: #{tpu_custom_call.1} parent=5 // pred_check
        _
      $region10: #{tpu_custom_call.1} parent=5 // pred_check_branch
        %195 = sbr.rel (%p192) target = $region12
      $region11: #{tpu_custom_call.1} parent=5 // pred_region
        %s196 = ssub.s32 %s15, 1
        // Predicated region
        $region13: #{tpu_custom_call.1} parent=11 // pred_check
          %p197 = pneg %p130
        $region14: #{tpu_custom_call.1} parent=11 // pred_check_branch
          %199 = sbr.rel (%p197) target = $region16
        $region15: #{tpu_custom_call.1} parent=11 // pred_region
          _
        $region16: #{tpu_custom_call.1} parent=11 // pred_fallthru
          _
      $region12: #{tpu_custom_call.1} parent=5 // pred_fallthru
        _
      %p200 = scmp.lt.s32.totalorder %s15, 2
      // Predicated region
      $region17: #{tpu_custom_call.1} parent=5 // pred_check
        %p201 = pneg %p200
      $region18: #{tpu_custom_call.1} parent=5 // pred_check_branch
        %203 = sbr.rel (%p201) target = $region20
      $region19: #{tpu_custom_call.1} parent=5 // pred_region
        // Predicated region
        $region21: #{tpu_custom_call.1} parent=19 // pred_check
          %p204 = pneg %p49
        $region22: #{tpu_custom_call.1} parent=19 // pred_check_branch
          %206 = sbr.rel (%p204) target = $region24
        $region23: #{tpu_custom_call.1} parent=19 // pred_region
          %p207 = scmp.lt.s32.totalorder %s22, 1
          %s208 = scalar_select %p207, %s22, 1
          %p209 = scmp.lt.s32.totalorder %s23, 0
          %s210 = scalar_select %p209, %s23, 0
          %s211 = sadd.s32 %s210, %s208
          %s212 = smul.addr %s211, 4
          %s213 = scalar_lea.vmem %s0, %s212
        $region24: #{tpu_custom_call.1} parent=19 // pred_fallthru
          _
        // Predicated region
        $region25: #{tpu_custom_call.1} parent=19 // pred_check
          %p214 = pneg %p77
        $region26: #{tpu_custom_call.1} parent=19 // pred_check_branch
          %216 = sbr.rel (%p214) target = $region28
        $region27: #{tpu_custom_call.1} parent=19 // pred_region
          %p217 = scmp.lt.s32.totalorder %s22, 1
          %s218 = scalar_select %p217, %s22, 1
          %p219 = scmp.lt.s32.totalorder %s23, 0
          %s220 = scalar_select %p219, %s23, 0
          %s221 = smul.addr %s218, 4
          %s222 = sadd.s32 %s220, %s221
          %s223 = smul.addr %s222, 8
          %s224 = scalar_lea.vmem %s1, %s223
        $region28: #{tpu_custom_call.1} parent=19 // pred_fallthru
          _
        // Predicated region
        $region29: #{tpu_custom_call.1} parent=19 // pred_check
          %p225 = pneg %p103
        $region30: #{tpu_custom_call.1} parent=19 // pred_check_branch
          %227 = sbr.rel (%p225) target = $region32
        $region31: #{tpu_custom_call.1} parent=19 // pred_region
          %p228 = scmp.lt.s32.totalorder %s22, 1
          %s229 = scalar_select %p228, %s22, 1
          %s230 = smul.addr %s229, 4
          %s231 = smul.addr %s230, 8
          %s232 = scalar_lea.vmem %s2, %s231
        $region32: #{tpu_custom_call.1} parent=19 // pred_fallthru
          _
      $region20: #{tpu_custom_call.1} parent=5 // pred_fallthru
        _
      %p233 = scmp.le.s32.totalorder 1, %s15
      %p234 = scmp.lt.s32.totalorder %s15, 3
      %p235 = pnand %p233, %p234
      %p236 = pneg %p235
      // Predicated region
      $region33: #{tpu_custom_call.1} parent=5 // pred_check
        _
      $region34: #{tpu_custom_call.1} parent=5 // pred_check_branch
        %238 = sbr.rel (%p235) target = $region36
      $region35: #{tpu_custom_call.1} parent=5 // pred_region
        %s239 = ssub.s32 %s15, 1
        %p240 = scmp.lt.s32.totalorder %s24, 1
        %s241 = scalar_select %p240, %s24, 1
        %p242 = scmp.lt.s32.totalorder %s25, 0
        %s243 = scalar_select %p242, %s25, 0
        %s244 = sadd.s32 %s243, %s241
        %s245 = smul.addr %s244, 4
        %s246 = scalar_lea.vmem %s0, %s245
        %p247 = pneg %p55
        %p248 = pneg %p52
        %p249 = scmp.lt.s32.totalorder %s24, 1
        %s250 = scalar_select %p249, %s24, 1
        %p251 = scmp.lt.s32.totalorder %s25, 0
        %s252 = scalar_select %p251, %s25, 0
        %s253 = smul.addr %s250, 4
        %s254 = sadd.s32 %s252, %s253
        %s255 = smul.addr %s254, 8
        %s256 = scalar_lea.vmem %s1, %s255
        %p257 = pneg %p83
        %p258 = pneg %p80
        %p259 = scmp.lt.s32.totalorder %s24, 1
        %s260 = scalar_select %p259, %s24, 1
        %s261 = smul.addr %s260, 4
        %s262 = smul.addr %s261, 8
        %s263 = scalar_lea.vmem %s2, %s262
        %p264 = pneg %p109
        %p265 = pneg %p106
        %p266 = pneg %p130
        %p267 = pneg %p127
        %p268 = pneg %p156
        %p269 = pneg %p153
        %p270 = scmp.lt.s32.totalorder %s24, 1
        %s271 = scalar_select %p270, %s24, 1
        %s272 = smul.addr %s271, 4
        %s273 = smul.addr %s272, 8
        %s274 = scalar_lea.vmem %s4, %s273
        %p275 = pneg %p182
        %p276 = pneg %p179
        %s277 = sand.u32 %s169, 1
        %s278 = scalar_lea.sflag [#allocation4], %s277
        %s279 = sand.u32 %s169, 1
        %s280 = smul.addr %s279, 8
        %s281 = scalar_lea.vmem [#allocation3], %s280
        %p282 = scmp.lt.s32.totalorder %s24, 1
        %s283 = scalar_select %p282, %s24, 1
        %p284 = scmp.lt.s32.totalorder %s25, 0
        %s285 = scalar_select %p284, %s25, 0
        %s286 = sadd.s32 %s285, %s283
        %s287 = smul.addr %s286, 4
        %s288 = scalar_lea.vmem %s0, %s287
        %p289 = scmp.lt.s32.totalorder %s24, 1
        %s290 = scalar_select %p289, %s24, 1
        %p291 = scmp.lt.s32.totalorder %s25, 0
        %s292 = scalar_select %p291, %s25, 0
        %s293 = smul.addr %s290, 4
        %s294 = sadd.s32 %s292, %s293
        %s295 = smul.addr %s294, 8
        %s296 = scalar_lea.vmem %s1, %s295
        %p297 = scmp.lt.s32.totalorder %s24, 1
        %s298 = scalar_select %p297, %s24, 1
        %s299 = smul.addr %s298, 4
        %s300 = smul.addr %s299, 8
        %s301 = scalar_lea.vmem %s2, %s300
        %p302 = scmp.lt.s32.totalorder %s24, 1
        %s303 = scalar_select %p302, %s24, 1
        %s304 = smul.addr %s303, 4
        %s305 = smul.addr %s304, 8
        %s306 = scalar_lea.vmem %s4, %s305
        %p307 = scmp.eq.s32.totalorder %s25, 0
        // Predicated region
        $region37: #{tpu_custom_call.1} parent=35 // pred_check
          %p308 = pneg %p307
        $region38: #{tpu_custom_call.1} parent=35 // pred_check_branch
          %310 = sbr.rel (%p308) target = $region40
        $region39: #{tpu_custom_call.1} parent=35 // pred_region
          %vm311 = vcmask 64512
          %312 = vst.msk [vmem:[#allocation2] sm:$0xff] %vm311, 0.0
          %313 = vst.msk [vmem:[#allocation2 + $0x8] sm:$0xff] %vm311, 0.0
          %314 = vst.msk [vmem:[#allocation2 + $0x10] sm:$0xff] %vm311, 0.0
          %315 = vst.msk [vmem:[#allocation2 + $0x18] sm:$0xff] %vm311, 0.0
        $region40: #{tpu_custom_call.1} parent=35 // pred_fallthru
          _
        %v316 = vld [vmem:[%s3] sm:$0xff]
        %v317 = vld [vmem:[%s3 + $0x8] sm:$0xff]
        %v318 = vld [vmem:[%s3 + $0x10] sm:$0xff]
        %v319 = vld [vmem:[%s3 + $0x18] sm:$0xff]
        %v320 = vld [vmem:[%s288] sm:$0xf]
        %v321 = vld [vmem:[%s301] sm:$0xff]
        %v322 = vld [vmem:[%s301 + $0x8] sm:$0xff]
        %v323 = vld [vmem:[%s301 + $0x10] sm:$0xff]
        %v324 = vld [vmem:[%s301 + $0x18] sm:$0xff]
        %326 = vset.pattern.permute.xlu0 0
        %327 = vperm.xlu0 %326, %v321
        %v328 = vpop.permute.xlu0 %327
        %331 = vset.pattern.permute.xlu0 0
        %332 = vperm.xlu0 %331, %v322
        %v333 = vpop.permute.xlu0 %332
        %336 = vset.pattern.permute.xlu0 0
        %337 = vperm.xlu0 %336, %v323
        %v338 = vpop.permute.xlu0 %337
        %341 = vset.pattern.permute.xlu0 0
        %342 = vperm.xlu0 %341, %v324
        %v343 = vpop.permute.xlu0 %342
        %vm345 = vcmask 31744
        %v347 = vsel %vm345, %v316, 0
        %v350 = vsel %vm345, %v317, 0
        %v353 = vsel %vm345, %v318, 0
        %v356 = vsel %vm345, %v319, 0
        %vm358 = vcmask 1043456
        %v360 = vsel %vm358, %v320, 0
        %362 = vmatprep.subr.mxu0 0.0
        %363 = vmatpush1.msra.mxu0 %v360
        %364 = vmatprep.subr.mxu0 0.0
        %365 = vmatpush1.msra.mxu0 0.0
        %366 = vmatprep.subr.mxu0 0.0
        %367 = vmatpush1.msra.mxu0 0.0
        %368 = vmatprep.subr.mxu0 0.0
        %369 = vmatpush1.msra.mxu0 0.0
        %370 = vmatprep.subr.mxu0 0.0
        %371 = vmatpush1.msra.mxu0 0.0
        %372 = vmatprep.subr.mxu0 0.0
        %373 = vmatpush1.msra.mxu0 0.0
        %374 = vmatprep.subr.mxu0 0.0
        %375 = vmatpush1.msra.mxu0 0.0
        %376 = vmatprep.subr.mxu0 0.0
        %377 = vmatpush1.msra.mxu0 0.0
        %378 = vmatprep.subr.mxu0 0.0
        %379 = vmatpush1.msra.mxu0 0.0
        %380 = vmatprep.subr.mxu0 0.0
        %381 = vmatpush1.msra.mxu0 0.0
        %382 = vmatprep.subr.mxu0 0.0
        %383 = vmatpush1.msra.mxu0 0.0
        %384 = vmatprep.subr.mxu0 0.0
        %385 = vmatpush1.msra.mxu0 0.0
        %386 = vmatprep.subr.mxu0 0.0
        %387 = vmatpush1.msra.mxu0 0.0
        %388 = vmatprep.subr.mxu0 0.0
        %389 = vmatpush1.msra.mxu0 0.0
        %390 = vmatprep.subr.mxu0 0.0
        %391 = vmatpush1.msra.mxu0 0.0
        %392 = vmatprep.subr.mxu0 0.0
        %393 = vmatpush1.msra.mxu0 0.0
        %394 = vmatprep.subr.mxu0 0.0
        %395 = vmatpush1.msra.mxu0 0.0
        %396 = vmatprep.subr.mxu0 0.0
        %397 = vmatpush1.msra.mxu0 0.0
        %398 = vmatprep.subr.mxu0 0.0
        %399 = vmatpush1.msra.mxu0 0.0
        %400 = vmatprep.subr.mxu0 0.0
        %401 = vmatpush1.msra.mxu0 0.0
        %402 = vmatprep.subr.mxu0 0.0
        %403 = vmatpush1.msra.mxu0 0.0
        %404 = vmatprep.subr.mxu0 0.0
        %405 = vmatpush1.msra.mxu0 0.0
        %406 = vmatprep.subr.mxu0 0.0
        %407 = vmatpush1.msra.mxu0 0.0
        %408 = vmatprep.subr.mxu0 0.0
        %409 = vmatpush1.msra.mxu0 0.0
        %410 = vmatprep.subr.mxu0 0.0
        %411 = vmatpush1.msra.mxu0 0.0
        %412 = vmatprep.subr.mxu0 0.0
        %413 = vmatpush1.msra.mxu0 0.0
        %414 = vmatprep.subr.mxu0 0.0
        %415 = vmatpush1.msra.mxu0 0.0
        %416 = vmatprep.subr.mxu0 0.0
        %417 = vmatpush1.msra.mxu0 0.0
        %418 = vmatprep.subr.mxu0 0.0
        %419 = vmatpush1.msra.mxu0 0.0
        %420 = vmatprep.subr.mxu0 0.0
        %421 = vmatpush1.msra.mxu0 0.0
        %422 = vmatprep.subr.mxu0 0.0
        %423 = vmatpush1.msra.mxu0 0.0
        %424 = vmatprep.subr.mxu0 0.0
        %425 = vmatpush1.msra.mxu0 0.0
        %426 = vmatprep.mubr.f32.mxu0 0.0
        %427 = vmatmul.mubr.f32.gmra.mrb[0].mxu0 %v347
        %v428 = vpop.f32.mrb[0].mxu0
        %v429 = vadd.f32 %v328, %v428
        %v430 = vpop.f32.mrb[0].mxu0
        %431 = vmatprep.mubr.f32.mxu0 0.0
        %432 = vmatmul.mubr.f32.gmra.mrb[0].mxu0 %v350
        %v433 = vpop.f32.mrb[0].mxu0
        %v434 = vadd.f32 %v333, %v433
        %v435 = vpop.f32.mrb[0].mxu0
        %436 = vmatprep.mubr.f32.mxu0 0.0
        %437 = vmatmul.mubr.f32.gmra.mrb[0].mxu0 %v353
        %v438 = vpop.f32.mrb[0].mxu0
        %v439 = vadd.f32 %v338, %v438
        %v440 = vpop.f32.mrb[0].mxu0
        %441 = vmatprep.mubr.f32.mxu0 0.0
        %442 = vmatmul.mubr.f32.gmra.mrb[0].mxu0 %v356
        %v443 = vpop.f32.mrb[0].mxu0
        %v444 = vadd.f32 %v343, %v443
        %v445 = vpop.f32.mrb[0].mxu0
        %446 = vdwg.mxu0
        %v447 = vld [vmem:[%s296] sm:$0xff]
        %v448 = vld [vmem:[%s296 + $0x8] sm:$0xff]
        %v449 = vld [vmem:[%s296 + $0x10] sm:$0xff]
        %v450 = vld [vmem:[%s296 + $0x18] sm:$0xff]
        %v451 = vsub.f32 %v429, %v447
        %v452 = vsub.f32 %v434, %v448
        %v453 = vsub.f32 %v439, %v449
        %v454 = vsub.f32 %v444, %v450
        %v455 = vlaneseq
        %v456 = vand.u32 %v455, 127
        %s457 = smul.u32 %s25, 8
        %s458 = ssub.s32 8, %s457
        %v459 = vstv %s458
        %vm460 = vcmp.lt.s32.totalorder %v456, %v459
        %v461 = vsel %vm460, %v451, 0.0
        %v462 = vsel %vm460, %v452, 0.0
        %v463 = vsel %vm460, %v453, 0.0
        %v464 = vsel %vm460, %v454, 0.0
        %v465 = vld [vmem:[#allocation2] sm:$0xff]
        %v466 = vld [vmem:[#allocation2 + $0x8] sm:$0xff]
        %v467 = vld [vmem:[#allocation2 + $0x10] sm:$0xff]
        %v468 = vld [vmem:[#allocation2 + $0x18] sm:$0xff]
        %v469 = vmul.f32 %v461, %v461
        %v470 = vmul.f32 %v462, %v462
        %v471 = vmul.f32 %v463, %v463
        %v472 = vmul.f32 %v464, %v464
        %v473 = vadd.f32 %v465, %v469
        %v474 = vadd.f32 %v466, %v470
        %v475 = vadd.f32 %v467, %v471
        %v476 = vadd.f32 %v468, %v472
        %vm477 = vcmask 64512
        %478 = vst.msk [vmem:[#allocation2] sm:$0xff] %vm477, %v473
        %479 = vst.msk [vmem:[#allocation2 + $0x8] sm:$0xff] %vm477, %v474
        %480 = vst.msk [vmem:[#allocation2 + $0x10] sm:$0xff] %vm477, %v475
        %481 = vst.msk [vmem:[#allocation2 + $0x18] sm:$0xff] %vm477, %v476
        // Predicated region
        $region41: #{tpu_custom_call.1} parent=35 // pred_check
          %p482 = pneg %p307
        $region42: #{tpu_custom_call.1} parent=35 // pred_check_branch
          %484 = sbr.rel (%p482) target = $region44
        $region43: #{tpu_custom_call.1} parent=35 // pred_region
          %v485 = vld [vmem:[#allocation2] sm:$0xff]
          %v486 = vld [vmem:[#allocation2 + $0x8] sm:$0xff]
          %v487 = vld [vmem:[#allocation2 + $0x10] sm:$0xff]
          %v488 = vld [vmem:[#allocation2 + $0x18] sm:$0xff]
          %v489 = vsel %vm477, %v485, 0.0
          %v490 = vsel %vm477, %v486, 0.0
          %v491 = vadd.f32 %v489, %v490
          %v492 = vsel %vm477, %v487, 0.0
          %v493 = vadd.f32 %v491, %v492
          %v494 = vsel %vm477, %v488, 0.0
          %v495 = vadd.f32 %v493, %v494
          %496 = vadd.xlane.f32.xlu0 %v495
          %v497 = vpop.xlane.xlu0 %496
          %v498 = vrot.slane %v497, 4
          %v499 = vadd.f32 %v497, %v498
          %v500 = vrot.slane %v499, 2
          %v501 = vadd.f32 %v499, %v500
          %v502 = vrot.slane %v501, 1
          %v503 = vadd.f32 %v501, %v502
          %s504 = vtos %v503
          %v505 = vstv %s504
          %506 = vst [vmem:[%s281] sm:$0xff] %v505
          %511 = vrot.lane.b32.xlu0 %v429, 121
          %v512 = vpop.permute.xlu0 %511
          %513 = vrot.lane.b32.xlu0 %v434, 121
          %v514 = vpop.permute.xlu0 %513
          %515 = vrot.lane.b32.xlu0 %v439, 121
          %v516 = vpop.permute.xlu0 %515
          %517 = vrot.lane.b32.xlu0 %v444, 121
          %v518 = vpop.permute.xlu0 %517
          %vm523 = vcmask 7168
          %524 = vst.msk [vmem:[%s306] sm:$0xff] %vm523, %v512
          %525 = vst.msk [vmem:[%s306 + $0x8] sm:$0xff] %vm523, %v514
          %526 = vst.msk [vmem:[%s306 + $0x10] sm:$0xff] %vm523, %v516
          %527 = vst.msk [vmem:[%s306 + $0x18] sm:$0xff] %vm523, %v518
        $region44: #{tpu_custom_call.1} parent=35 // pred_fallthru
          _
        %p528 = scmp.lt.s32.totalorder %s24, 1
        %s529 = scalar_select %p528, %s24, 1
        %s530 = smul.addr %s529, 4
        %s531 = smul.addr %s530, 8
        %s532 = scalar_lea.vmem %s4, %s531
        %s533 = sand.u32 %s169, 1
        %s534 = scalar_lea.sflag [#allocation4], %s533
        %s535 = sand.u32 %s169, 1
        %s536 = smul.addr %s535, 8
        %s537 = scalar_lea.vmem [#allocation3], %s536
        // Predicated region
        $region45: #{tpu_custom_call.1} parent=35 // pred_check
          %p538 = pneg %p153
        $region46: #{tpu_custom_call.1} parent=35 // pred_check_branch
          %540 = sbr.rel (%p538) target = $region48
        $region47: #{tpu_custom_call.1} parent=35 // pred_region
          _
        $region48: #{tpu_custom_call.1} parent=35 // pred_fallthru
          _
        // Predicated region
        $region49: #{tpu_custom_call.1} parent=35 // pred_check
          %p541 = pneg %p179
        $region50: #{tpu_custom_call.1} parent=35 // pred_check_branch
          %543 = sbr.rel (%p541) target = $region52
        $region51: #{tpu_custom_call.1} parent=35 // pred_region
          %s545 = ssub.s32 128, 128
          %546 = vsyncadd %s534, %s545
          %s547 = smul.addr %s24, 128
          %s548 = scalar_lea.hbm %s5, %s547
          %s550 = sshll.u32 %s537, 4
          %s551 = int_to_ptr.vmem [resolvable:$true] %s550
          %553 = dma.vmem_to_hbm [thread:$0]  %s551, 128, %s548, %s534
        $region52: #{tpu_custom_call.1} parent=35 // pred_fallthru
          _
      $region36: #{tpu_custom_call.1} parent=5 // pred_fallthru
        _
      %p554 = scmp.le.s32.totalorder 2, %s15
      // Predicated region
      $region53: #{tpu_custom_call.1} parent=5 // pred_check
        %p555 = pneg %p554
      $region54: #{tpu_custom_call.1} parent=5 // pred_check_branch
        %557 = sbr.rel (%p555) target = $region56
      $region55: #{tpu_custom_call.1} parent=5 // pred_region
        %s558 = ssub.s32 %s15, 2
        // Predicated region
        $region57: #{tpu_custom_call.1} parent=55 // pred_check
          %p559 = pneg %p159
        $region58: #{tpu_custom_call.1} parent=55 // pred_check_branch
          %561 = sbr.rel (%p559) target = $region60
        $region59: #{tpu_custom_call.1} parent=55 // pred_region
          %p562 = scmp.lt.s32.totalorder %s26, 1
          %s563 = scalar_select %p562, %s26, 1
          %s564 = smul.addr %s563, 4
          %s565 = smul.addr %s564, 8
          %s566 = scalar_lea.vmem %s4, %s565
        $region60: #{tpu_custom_call.1} parent=55 // pred_fallthru
          _
        // Predicated region
        $region61: #{tpu_custom_call.1} parent=55 // pred_check
          %p567 = pneg %p185
        $region62: #{tpu_custom_call.1} parent=55 // pred_check_branch
          %569 = sbr.rel (%p567) target = $region64
        $region63: #{tpu_custom_call.1} parent=55 // pred_region
          %s570 = sand.u32 %s170, 1
          %s571 = scalar_lea.sflag [#allocation4], %s570
          %s572 = sand.u32 %s170, 1
          %s573 = smul.addr %s572, 8
          %s574 = scalar_lea.vmem [#allocation3], %s573
          %575 = dma.done %s571, 128
        $region64: #{tpu_custom_call.1} parent=55 // pred_fallthru
          _
      $region56: #{tpu_custom_call.1} parent=5 // pred_fallthru
        _
    $region6: #{tpu_custom_call.1} parent=1 // loop_footer
      %s19 = sadd.s32 1, %s15
    $region7: #{tpu_custom_call.1} parent=1 // loop_footer_branch
      %14 = sbr.rel target = $region3
    $region8: #{tpu_custom_call.1} parent=1 // loop_exit
      _
    %576 = vsyncpa [#allocation4], 1
    %s577 = scalar_lea.sflag [#allocation4], 1
    %578 = vsyncpa %s577, 1

</llo_original>
